<compile_context>
chip_gen: v6e
topology: v6e:2x2x1
jax: 0.10.0
libtpu: 0.0.40
codegen_flags: <defaults>
</compile_context>

<pallas_src>
import jax
import jax.numpy as jnp
from jax.experimental import pallas as pl
from jax.experimental.pallas import tpu as pltpu


def _round_up(x, m):
    return (x + m - 1) // m * m


# ---------------------------------------------------------------------------
# Kernels
# ---------------------------------------------------------------------------
def _lambda_train_kernel(x_ref, w_ref, b_ref, eps_ref,
                         mean_ref, logvar_ref, z_ref):
    lp = mean_ref.shape[-1]                      # padded latent width (mult of 128)
    # Single fused MXU matmul over the concatenated [mean | logvar] weights.
    y = jnp.dot(x_ref[...], w_ref[...],
                preferred_element_type=jnp.float32) + b_ref[...]
    mean = y[:, :lp]                             # tile-aligned static slices
    logvar = y[:, lp:]
    mean_ref[...] = mean.astype(mean_ref.dtype)
    logvar_ref[...] = logvar.astype(logvar_ref.dtype)
    # Reparameterization tail, kept in f32 (EUP exp + VPU FMA), cast once.
    std = jnp.exp(0.5 * logvar)
    eps = eps_ref[...].astype(jnp.float32)
    z_ref[...] = (eps * std + mean).astype(z_ref.dtype)


def _lambda_eval_kernel(x_ref, w_ref, b_ref, mean_ref, logvar_ref):
    lp = mean_ref.shape[-1]
    y = jnp.dot(x_ref[...], w_ref[...],
                preferred_element_type=jnp.float32) + b_ref[...]
    mean_ref[...] = y[:, :lp].astype(mean_ref.dtype)
    logvar_ref[...] = y[:, lp:].astype(logvar_ref.dtype)


# ---------------------------------------------------------------------------
# Wrapper
# ---------------------------------------------------------------------------
def lambda_forward(x, w_mean, b_mean, w_logvar, b_logvar, eps=None, *,
                   training=True):
    """VRAE Lambda head.

    x: (B, H); w_*: (H, L) (pre-transposed vs torch); b_*: (L,);
    eps: (B, L), required only when training=True.
    Returns (out, mean, logvar): out = reparameterized z (training) or mean (eval).
    """
    B, H = x.shape
    L = w_mean.shape[1]
    dtype = x.dtype
    itemsize = x.dtype.itemsize

    # Lane-dense latent width.
    Lp = _round_up(L, 128)
    pad_l = Lp - L

    # Batch tile: large enough to pipeline DMA, small enough for v7x VMEM
    # (resident fused weights + double-buffered streamed tiles <= ~16 MiB).
    n_out = 3 if training else 2
    n_in_streams = 1 if training else 0          # eps
    resident = (H * 2 * Lp + 2 * Lp) * itemsize

    def _vmem_bytes(tm_):
        streamed = tm_ * (H + (n_out + n_in_streams) * Lp) * itemsize
        return resident + 2 * streamed           # double-buffered

    tm = min(512, _round_up(B, 8))
    while tm > 8 and _vmem_bytes(tm) > 16 * 1024 * 1024:
        tm = max(8, (tm // 2) // 8 * 8)
    Bp = _round_up(B, tm)
    grid = (Bp // tm,)

    # Fuse + pad parameters in the wrapper (cheap, one-time XLA ops).
    w_cat = jnp.concatenate(
        [jnp.pad(w_mean, ((0, 0), (0, pad_l))),
         jnp.pad(w_logvar, ((0, 0), (0, pad_l)))], axis=1)          # (H, 2*Lp)
    b_cat = jnp.concatenate(
        [jnp.pad(b_mean, (0, pad_l)),
         jnp.pad(b_logvar, (0, pad_l))]).reshape(1, 2 * Lp)          # (1, 2*Lp)
    x_p = jnp.pad(x, ((0, Bp - B), (0, 0)))                          # (Bp, H)

    # BlockSpecs: x/eps/outputs streamed over the batch grid; weights resident.
    x_spec = pl.BlockSpec((tm, H), lambda i: (i, 0))
    w_spec = pl.BlockSpec((H, 2 * Lp), lambda i: (0, 0))
    b_spec = pl.BlockSpec((1, 2 * Lp), lambda i: (0, 0))
    o_spec = pl.BlockSpec((tm, Lp), lambda i: (i, 0))

    compiler_params = pltpu.CompilerParams(
        dimension_semantics=("parallel",))       # megacore split on v7x

    flops = 2 * Bp * H * 2 * Lp

    if training:
        if eps is None:
            raise ValueError("eps is required in training mode")
        eps_p = jnp.pad(eps.astype(dtype), ((0, Bp - B), (0, pad_l)))
        cost = pl.CostEstimate(
            flops=flops,
            transcendentals=Bp * Lp,
            bytes_accessed=(x_p.size + w_cat.size + b_cat.size + eps_p.size
                            + 3 * Bp * Lp) * itemsize)
        mean, logvar, z = pl.pallas_call(
            _lambda_train_kernel,
            out_shape=(jax.ShapeDtypeStruct((Bp, Lp), dtype),) * 3,
            grid=grid,
            in_specs=[x_spec, w_spec, b_spec, o_spec],
            out_specs=(o_spec, o_spec, o_spec),
            compiler_params=compiler_params,
            cost_estimate=cost,
        )(x_p, w_cat, b_cat, eps_p)
        out = z
    else:
        cost = pl.CostEstimate(
            flops=flops,
            transcendentals=0,
            bytes_accessed=(x_p.size + w_cat.size + b_cat.size
                            + 2 * Bp * Lp) * itemsize)
        mean, logvar = pl.pallas_call(
            _lambda_eval_kernel,
            out_shape=(jax.ShapeDtypeStruct((Bp, Lp), dtype),) * 2,
            grid=grid,
            in_specs=[x_spec, w_spec, b_spec],
            out_specs=(o_spec, o_spec),
            compiler_params=compiler_params,
            cost_estimate=cost,
        )(x_p, w_cat, b_cat)
        out = mean

    # Strip batch/lane padding.
    return out[:B, :L], mean[:B, :L], logvar[:B, :L]


def init_lambda_params(key, hidden_size_3, latent_length, dtype=jnp.float32):
    """Deterministic synthetic init mirroring the PyTorch module's __init__."""
    k1, k2, k3, k4 = jax.random.split(key, 4)
    # Xavier-uniform for weights (torch weight is (L, H); fan_in=H, fan_out=L).
    bound_w = (6.0 / (hidden_size_3 + latent_length)) ** 0.5
    # Stored pre-transposed as (H, L).
    w_mean = jax.random.uniform(k1, (hidden_size_3, latent_length),
                                dtype, -bound_w, bound_w)
    w_logvar = jax.random.uniform(k2, (hidden_size_3, latent_length),
                                  dtype, -bound_w, bound_w)
    # Default torch Linear bias init: U(-1/sqrt(fan_in), 1/sqrt(fan_in)).
    bound_b = 1.0 / (hidden_size_3 ** 0.5)
    b_mean = jax.random.uniform(k3, (latent_length,), dtype, -bound_b, bound_b)
    b_logvar = jax.random.uniform(k4, (latent_length,), dtype, -bound_b, bound_b)
    return w_mean, b_mean, w_logvar, b_logvar


if __name__ == "__main__":
    batch = 8
    hidden_size_3 = 32
    latent_length = 16

    key = jax.random.PRNGKey(0)
    kx, kp, ke = jax.random.split(key, 3)

    x = jax.random.normal(kx, (batch, hidden_size_3), jnp.float32)
    w_mean, b_mean, w_logvar, b_logvar = init_lambda_params(
        kp, hidden_size_3, latent_length)
    # TODO(synk): eps could be generated in-kernel via pltpu.prng_* to drop one
    # HBM stream; kept host-side here for deterministic reference checking.
    eps = jax.random.normal(ke, (batch, latent_length), jnp.float32)

    # Training-mode forward (reparameterized sample).
    z, mean, logvar = lambda_forward(x, w_mean, b_mean, w_logvar, b_logvar,
                                     eps, training=True)
    jax.block_until_ready(z)

    # Reference check in plain JAX.
    ref_mean = x @ w_mean + b_mean
    ref_logvar = x @ w_logvar + b_logvar
    ref_z = eps * jnp.exp(0.5 * ref_logvar) + ref_mean
    assert jnp.allclose(mean, ref_mean, atol=1e-5, rtol=1e-5)
    assert jnp.allclose(logvar, ref_logvar, atol=1e-5, rtol=1e-5)
    assert jnp.allclose(z, ref_z, atol=1e-5, rtol=1e-5)

    # Eval-mode forward returns the mean (no eps stream, no z compute).
    z_eval, mean_eval, logvar_eval = lambda_forward(
        x, w_mean, b_mean, w_logvar, b_logvar, training=False)
    jax.block_until_ready(z_eval)
    assert jnp.allclose(z_eval, ref_mean, atol=1e-5, rtol=1e-5)
    assert jnp.allclose(logvar_eval, ref_logvar, atol=1e-5, rtol=1e-5)

    print("KERNEL_OK")
</pallas_src>

<mosaic_0001>
module attributes {stable_mosaic.version = 11 : i64} {
  func.func @_lambda_train_kernel(%arg0: i32, %arg1: memref<8x32xf32, #tpu.memory_space<vmem>>, %arg2: memref<32x256xf32, #tpu.memory_space<vmem>>, %arg3: memref<1x256xf32, #tpu.memory_space<vmem>>, %arg4: memref<8x128xf32, #tpu.memory_space<vmem>>, %arg5: memref<8x128xf32, #tpu.memory_space<vmem>>, %arg6: memref<8x128xf32, #tpu.memory_space<vmem>>, %arg7: memref<8x128xf32, #tpu.memory_space<vmem>>) attributes {dimension_semantics = [#tpu.dimension_semantics<parallel>], iteration_bounds = array<i64: 1>, scalar_prefetch = 0 : i64, scratch_operands = 0 : i64, tpu.core_type = #tpu.core_type<tc>, window_params = [{transform_indices = @transform_0, window_bounds = array<i64: 8, 32>}, {pipeline_mode = #tpu.pipeline_mode<synchronous>, transform_indices = @transform_1, window_bounds = array<i64: 32, 256>}, {pipeline_mode = #tpu.pipeline_mode<synchronous>, transform_indices = @transform_2, window_bounds = array<i64: 1, 256>}, {transform_indices = @transform_3, window_bounds = array<i64: 8, 128>}, {transform_indices = @transform_4, window_bounds = array<i64: 8, 128>}, {transform_indices = @transform_5, window_bounds = array<i64: 8, 128>}, {transform_indices = @transform_6, window_bounds = array<i64: 8, 128>}]} {
    %c0 = arith.constant 0 : index
    %c0_0 = arith.constant 0 : index
    %0 = vector.load %arg1[%c0, %c0_0] : memref<8x32xf32, #tpu.memory_space<vmem>>, vector<8x32xf32>
    %c0_1 = arith.constant 0 : index
    %c0_2 = arith.constant 0 : index
    %1 = vector.load %arg2[%c0_1, %c0_2] : memref<32x256xf32, #tpu.memory_space<vmem>>, vector<32x256xf32>
    %cst = arith.constant dense<0.000000e+00> : vector<8x256xf32>
    %2 = tpu.matmul %0, %1, %cst {dimension_numbers = #tpu.dot_dimension_numbers<[1], [0], [0], [1], [0, 0, 1, 1], [], []>} : vector<8x32xf32>, vector<32x256xf32>, vector<8x256xf32> -> vector<8x256xf32>
    %c0_3 = arith.constant 0 : index
    %c0_4 = arith.constant 0 : index
    %3 = vector.load %arg3[%c0_3, %c0_4] : memref<1x256xf32, #tpu.memory_space<vmem>>, vector<1x256xf32>
    %4 = vector.broadcast %3 : vector<1x256xf32> to vector<8x256xf32>
    %5 = arith.addf %2, %4 : vector<8x256xf32>
    %6 = vector.extract_strided_slice %5 {offsets = [0, 0], sizes = [8, 128], strides = [1, 1]} : vector<8x256xf32> to vector<8x128xf32>
    %7 = vector.extract_strided_slice %5 {offsets = [0, 128], sizes = [8, 128], strides = [1, 1]} : vector<8x256xf32> to vector<8x128xf32>
    %c0_5 = arith.constant 0 : index
    %c0_6 = arith.constant 0 : index
    %8 = vector.load %arg5[%c0_5, %c0_6] : memref<8x128xf32, #tpu.memory_space<vmem>>, vector<8x128xf32>
    tpu.vector_store %arg5[%c0_5, %c0_6], %6 {strides = array<i32>} : memref<8x128xf32, #tpu.memory_space<vmem>>, vector<8x128xf32>,
    %c0_7 = arith.constant 0 : index
    %c0_8 = arith.constant 0 : index
    %9 = vector.load %arg6[%c0_7, %c0_8] : memref<8x128xf32, #tpu.memory_space<vmem>>, vector<8x128xf32>
    tpu.vector_store %arg6[%c0_7, %c0_8], %7 {strides = array<i32>} : memref<8x128xf32, #tpu.memory_space<vmem>>, vector<8x128xf32>,
    %cst_9 = arith.constant 5.000000e-01 : f32
    %10 = vector.broadcast %cst_9 : f32 to vector<8x128xf32>
    %11 = arith.mulf %10, %7 : vector<8x128xf32>
    %12 = math.exp %11 : vector<8x128xf32>
    %c0_10 = arith.constant 0 : index
    %c0_11 = arith.constant 0 : index
    %13 = vector.load %arg4[%c0_10, %c0_11] : memref<8x128xf32, #tpu.memory_space<vmem>>, vector<8x128xf32>
    %14 = arith.mulf %13, %12 : vector<8x128xf32>
    %15 = arith.addf %14, %6 : vector<8x128xf32>
    %c0_12 = arith.constant 0 : index
    %c0_13 = arith.constant 0 : index
    %16 = vector.load %arg7[%c0_12, %c0_13] : memref<8x128xf32, #tpu.memory_space<vmem>>, vector<8x128xf32>
    tpu.vector_store %arg7[%c0_12, %c0_13], %15 {strides = array<i32>} : memref<8x128xf32, #tpu.memory_space<vmem>>, vector<8x128xf32>,
    return
  }
  func.func @transform_0(%arg0: i32) -> (i32, i32) {
    %c0_i32 = arith.constant 0 : i32
    %c0_i32_0 = arith.constant 0 : i32
    return %arg0, %c0_i32 : i32, i32
  }
  func.func @transform_1(%arg0: i32) -> (i32, i32) {
    %c0_i32 = arith.constant 0 : i32
    %c0_i32_0 = arith.constant 0 : i32
    %c0_i32_1 = arith.constant 0 : i32
    return %c0_i32, %c0_i32_0 : i32, i32
  }
  func.func @transform_2(%arg0: i32) -> (i32, i32) {
    %c0_i32 = arith.constant 0 : i32
    %c0_i32_0 = arith.constant 0 : i32
    %c0_i32_1 = arith.constant 0 : i32
    return %c0_i32, %c0_i32_0 : i32, i32
  }
  func.func @transform_3(%arg0: i32) -> (i32, i32) {
    %c0_i32 = arith.constant 0 : i32
    %c0_i32_0 = arith.constant 0 : i32
    return %arg0, %c0_i32 : i32, i32
  }
  func.func @transform_4(%arg0: i32) -> (i32, i32) {
    %c0_i32 = arith.constant 0 : i32
    %c0_i32_0 = arith.constant 0 : i32
    return %arg0, %c0_i32 : i32, i32
  }
  func.func @transform_5(%arg0: i32) -> (i32, i32) {
    %c0_i32 = arith.constant 0 : i32
    %c0_i32_0 = arith.constant 0 : i32
    return %arg0, %c0_i32 : i32, i32
  }
  func.func @transform_6(%arg0: i32) -> (i32, i32) {
    %c0_i32 = arith.constant 0 : i32
    %c0_i32_0 = arith.constant 0 : i32
    return %arg0, %c0_i32 : i32, i32
  }
}

</mosaic_0001>

<llo_original>
// kernel: tpu_custom_call.1
$region0: #{tpu_custom_call.1}
  #allocation0 [shape = 'u32[]', space=smem, size = 0x4, offset = 0x4, fixed_abs, tag = 'smem constant byte address 0x4 - core index']
  #allocation1 [shape = 'u32[144,128]{1,0:T(1,128)}', space=vmem, size = 0x12000, scoped, tag = 'internal scratch']
  %s0 = inlined_call_operand.hbm [shape: f32[8,32], index: 0, kind: input, shape index: {}]
  %s1 = inlined_call_operand.hbm [shape: f32[32,256], index: 1, kind: input, shape index: {}]
  %s2 = inlined_call_operand.vmem [shape: f32[1,256], index: 2, kind: input, shape index: {}]
  %s3 = inlined_call_operand.hbm [shape: f32[8,128], index: 3, kind: input, shape index: {}]
  %s4 = inlined_call_operand.hbm [shape: f32[8,128], index: 4, kind: output, shape index: {0}]
  %s5 = inlined_call_operand.hbm [shape: f32[8,128], index: 5, kind: output, shape index: {1}]
  %s6 = inlined_call_operand.hbm [shape: f32[8,128], index: 6, kind: output, shape index: {2}]
  %7 = xla_tuple %s4, %s5, %s6
  %s8 = sld [smem:[#allocation0]]
  $region54: #{tpu_custom_call.1} parent=0
    _
  %s10 = ssub.s32 1, %s8
  %s11 = scalar_select 0, %s10, %s8
  $region1: #{tpu_custom_call.1} parent=0
    #allocation2 [shape = 'u8[4096]{0}', space=vmem, size = 0x1000, scoped, tag = 'input window, operand 0, single buffered']
    #allocation3 [shape = 's32[1]{0}', space=sflag, size = 0x4, scoped, tag = 'scoped memory for tpu_custom_call.1']
    #allocation4 [shape = 's32[1]{0}', space=sflag, size = 0x4, scoped, tag = 'scoped memory for tpu_custom_call.1']
    #allocation5 [shape = 'u8[32768]{0}', space=vmem, size = 0x8000, scoped, tag = 'input window, operand 1, single buffered']
    #allocation6 [shape = 's32[1]{0}', space=sflag, size = 0x4, scoped, tag = 'scoped memory for tpu_custom_call.1']
    #allocation7 [shape = 'u8[4096]{0}', space=vmem, size = 0x1000, scoped, tag = 'input window, operand 3, single buffered']
    #allocation8 [shape = 'u8[4096]{0}', space=vmem, size = 0x1000, scoped, tag = 'output window, operand 0, single buffered']
    #allocation9 [shape = 'u8[4096]{0}', space=vmem, size = 0x1000, scoped, tag = 'output window, operand 1, single buffered']
    #allocation10 [shape = 's32[1]{0}', space=sflag, size = 0x4, scoped, tag = 'scoped memory for tpu_custom_call.1']
    #allocation11 [shape = 'u8[4096]{0}', space=vmem, size = 0x1000, scoped, tag = 'output window, operand 2, single buffered']
    %12 = vsyncpa [#allocation3], 0
    %13 = vsyncpa [#allocation6], 0
    %14 = vsyncpa [#allocation4], 0
    %15 = vsyncpa [#allocation10], 0
    // Predicated region
    $region2: #{tpu_custom_call.1} parent=1 // pred_check
      _
    $region3: #{tpu_custom_call.1} parent=1 // pred_check_branch
      %17 = sbr.rel (0) target = $region5
    $region4: #{tpu_custom_call.1} parent=1 // pred_region
      %s19 = ssub.s32 128, 128
      %20 = vsyncadd [#allocation3], %s19
      %s22 = sshll.u32 [#allocation2], 4
      %s23 = int_to_ptr.vmem [resolvable:$true] %s22
      %25 = dma.hbm_to_vmem [thread:$0]  %s0, 128, %s23, [#allocation3]
    $region5: #{tpu_custom_call.1} parent=1 // pred_fallthru
      _
    // Predicated region
    $region6: #{tpu_custom_call.1} parent=1 // pred_check
      _
    $region7: #{tpu_custom_call.1} parent=1 // pred_check_branch
      %27 = sbr.rel (0) target = $region9
    $region8: #{tpu_custom_call.1} parent=1 // pred_region
      %s29 = ssub.s32 1024, 1024
      %30 = vsyncadd [#allocation6], %s29
      %s31 = sshll.u32 [#allocation5], 4
      %s32 = int_to_ptr.vmem [resolvable:$true] %s31
      %37 = dma.hbm_to_vmem [thread:$0]  %s1, 1024, %s32, [#allocation6], 256, 256, 16
    $region9: #{tpu_custom_call.1} parent=1 // pred_fallthru
      _
    // Predicated region
    $region10: #{tpu_custom_call.1} parent=1 // pred_check
      _
    $region11: #{tpu_custom_call.1} parent=1 // pred_check_branch
      %39 = sbr.rel (0) target = $region13
    $region12: #{tpu_custom_call.1} parent=1 // pred_region
      _
    $region13: #{tpu_custom_call.1} parent=1 // pred_fallthru
      _
    // Predicated region
    $region14: #{tpu_custom_call.1} parent=1 // pred_check
      _
    $region15: #{tpu_custom_call.1} parent=1 // pred_check_branch
      %41 = sbr.rel (0) target = $region17
    $region16: #{tpu_custom_call.1} parent=1 // pred_region
      %s43 = ssub.s32 128, 128
      %44 = vsyncadd [#allocation6], %s43
      %s46 = sshll.u32 [#allocation7], 4
      %s47 = int_to_ptr.vmem [resolvable:$true] %s46
      %49 = dma.hbm_to_vmem [thread:$0]  %s3, 128, %s47, [#allocation6]
    $region17: #{tpu_custom_call.1} parent=1 // pred_fallthru
      _
    // Predicated region
    $region18: #{tpu_custom_call.1} parent=1 // pred_check
      _
    $region19: #{tpu_custom_call.1} parent=1 // pred_check_branch
      %51 = sbr.rel (0) target = $region21
    $region20: #{tpu_custom_call.1} parent=1 // pred_region
      %52 = dma.done [#allocation3], 128
    $region21: #{tpu_custom_call.1} parent=1 // pred_fallthru
      _
    // Predicated region
    $region22: #{tpu_custom_call.1} parent=1 // pred_check
      _
    $region23: #{tpu_custom_call.1} parent=1 // pred_check_branch
      %54 = sbr.rel (0) target = $region25
    $region24: #{tpu_custom_call.1} parent=1 // pred_region
      %55 = dma.done [#allocation6], 1024
    $region25: #{tpu_custom_call.1} parent=1 // pred_fallthru
      _
    // Predicated region
    $region26: #{tpu_custom_call.1} parent=1 // pred_check
      _
    $region27: #{tpu_custom_call.1} parent=1 // pred_check_branch
      %57 = sbr.rel (0) target = $region29
    $region28: #{tpu_custom_call.1} parent=1 // pred_region
      %58 = dma.done [#allocation6], 128
    $region29: #{tpu_custom_call.1} parent=1 // pred_fallthru
      _
    %v59 = vld [vmem:[#allocation2] sm:$0xff]
    %v60 = vld [vmem:[#allocation5] sm:$0xff]
    %v61 = vld [vmem:[#allocation5 + $0x8] sm:$0xff]
    %v62 = vld [vmem:[#allocation5 + $0x10] sm:$0xff]
    %v63 = vld [vmem:[#allocation5 + $0x18] sm:$0xff]
    %v64 = vld [vmem:[#allocation5 + $0x20] sm:$0xff]
    %v65 = vld [vmem:[#allocation5 + $0x28] sm:$0xff]
    %v66 = vld [vmem:[#allocation5 + $0x30] sm:$0xff]
    %v67 = vld [vmem:[#allocation5 + $0x38] sm:$0xff]
    %v68 = vld [vmem:[%s2] sm:$0x3]
    %v70 = vlaneseq
    %v71 = vshrl.u32 %v70, 7
    %v72 = vsub.s32 0, %v71
    %v73 = vrot.slane %v68, %v72
    %v74 = vlaneseq
    %v75 = vshrl.u32 %v74, 7
    %v76 = vsub.s32 1, %v75
    %v77 = vrot.slane %v68, %v76
    %vm80 = vcmask 261120
    %v82 = vsel %vm80, %v59, 0
    %84 = vmatprep.subr.mxu0 0.0
    %85 = vmatpush1.msra.mxu0 0.0
    %86 = vmatprep.subr.mxu0 0.0
    %87 = vmatpush1.msra.mxu0 0.0
    %88 = vmatprep.subr.mxu0 0.0
    %89 = vmatpush1.msra.mxu0 0.0
    %90 = vmatprep.subr.mxu0 0.0
    %91 = vmatpush1.msra.mxu0 0.0
    %92 = vmatprep.subr.mxu0 0.0
    %93 = vmatpush1.msra.mxu0 0.0
    %94 = vmatprep.subr.mxu0 0.0
    %95 = vmatpush1.msra.mxu0 0.0
    %96 = vmatprep.subr.mxu0 0.0
    %97 = vmatpush1.msra.mxu0 0.0
    %98 = vmatprep.subr.mxu0 0.0
    %99 = vmatpush1.msra.mxu0 0.0
    %100 = vmatprep.subr.mxu0 0.0
    %101 = vmatpush1.msra.mxu0 0.0
    %102 = vmatprep.subr.mxu0 0.0
    %103 = vmatpush1.msra.mxu0 0.0
    %104 = vmatprep.subr.mxu0 0.0
    %105 = vmatpush1.msra.mxu0 0.0
    %106 = vmatprep.subr.mxu0 0.0
    %107 = vmatpush1.msra.mxu0 0.0
    %108 = vmatprep.subr.mxu0 %v67
    %109 = vmatpush1.msra.mxu0 %v66
    %110 = vmatprep.subr.mxu0 %v65
    %111 = vmatpush1.msra.mxu0 %v64
    %112 = vmatprep.subr.mxu0 %v63
    %113 = vmatpush1.msra.mxu0 %v62
    %114 = vmatprep.subr.mxu0 %v61
    %115 = vmatpush1.msra.mxu0 %v60
    %116 = vmatprep.subr.mxu0 0.0
    %117 = vmatpush2.msra.mxu0 0.0
    %118 = vmatprep.subr.mxu0 0.0
    %119 = vmatpush2.msra.mxu0 0.0
    %120 = vmatprep.subr.mxu0 0.0
    %121 = vmatpush2.msra.mxu0 0.0
    %122 = vmatprep.subr.mxu0 0.0
    %123 = vmatpush2.msra.mxu0 0.0
    %124 = vmatprep.subr.mxu0 0.0
    %125 = vmatpush2.msra.mxu0 0.0
    %126 = vmatprep.subr.mxu0 0.0
    %127 = vmatpush2.msra.mxu0 0.0
    %128 = vmatprep.subr.mxu0 0.0
    %129 = vmatpush2.msra.mxu0 0.0
    %130 = vmatprep.subr.mxu0 0.0
    %131 = vmatpush2.msra.mxu0 0.0
    %132 = vmatprep.subr.mxu0 0.0
    %133 = vmatpush2.msra.mxu0 0.0
    %134 = vmatprep.subr.mxu0 0.0
    %135 = vmatpush2.msra.mxu0 0.0
    %136 = vmatprep.subr.mxu0 0.0
    %137 = vmatpush2.msra.mxu0 0.0
    %138 = vmatprep.subr.mxu0 0.0
    %139 = vmatpush2.msra.mxu0 0.0
    %140 = vmatprep.subr.mxu0 0.0
    %141 = vmatpush2.msra.mxu0 0.0
    %142 = vmatprep.subr.mxu0 0.0
    %143 = vmatpush2.msra.mxu0 0.0
    %144 = vmatprep.subr.mxu0 0.0
    %145 = vmatpush2.msra.mxu0 0.0
    %146 = vmatprep.subr.mxu0 0.0
    %147 = vmatpush2.msra.mxu0 0.0
    %148 = vmatprep.mubr.f32.mxu0 0.0
    %149 = vmatmul.mubr.f32.gmra.mxu0 %v82
    %v150 = vpop.f32.mrf.mxu0
    %v151 = vadd.f32 %v73, %v150
    %v152 = vpop.f32.mrf.mxu0
    %v153 = vadd.f32 %v77, %v152
    %154 = vdwg.mxu0
    %155 = vst [vmem:[#allocation8] sm:$0xff] %v151
    %156 = vst [vmem:[#allocation9] sm:$0xff] %v153
    %v157 = vmul.f32 %v153, 0.5
    %v158 = vmul.f32 %v157, 1.442695
    %v159 = vpow.pop %v158
    %v160 = vld [vmem:[#allocation7] sm:$0xff]
    %v161 = vmul.f32 %v160, %v159
    %v162 = vadd.f32 %v161, %v151
    %163 = vst [vmem:[#allocation11] sm:$0xff] %v162
    // Predicated region
    $region30: #{tpu_custom_call.1} parent=1 // pred_check
      _
    $region31: #{tpu_custom_call.1} parent=1 // pred_check_branch
      %165 = sbr.rel (0) target = $region33
    $region32: #{tpu_custom_call.1} parent=1 // pred_region
      %s167 = ssub.s32 128, 128
      %168 = vsyncadd [#allocation4], %s167
      %s170 = sshll.u32 [#allocation8], 4
      %s171 = int_to_ptr.vmem [resolvable:$true] %s170
      %173 = dma.vmem_to_hbm [thread:$0]  %s171, 128, %s4, [#allocation4]
    $region33: #{tpu_custom_call.1} parent=1 // pred_fallthru
      _
    // Predicated region
    $region34: #{tpu_custom_call.1} parent=1 // pred_check
      _
    $region35: #{tpu_custom_call.1} parent=1 // pred_check_branch
      %175 = sbr.rel (0) target = $region37
    $region36: #{tpu_custom_call.1} parent=1 // pred_region
      %s177 = ssub.s32 128, 128
      %178 = vsyncadd [#allocation10], %s177
      %s180 = sshll.u32 [#allocation9], 4
      %s181 = int_to_ptr.vmem [resolvable:$true] %s180
      %183 = dma.vmem_to_hbm [thread:$0]  %s181, 128, %s5, [#allocation10]
    $region37: #{tpu_custom_call.1} parent=1 // pred_fallthru
      _
    // Predicated region
    $region38: #{tpu_custom_call.1} parent=1 // pred_check
      _
    $region39: #{tpu_custom_call.1} parent=1 // pred_check_branch
      %185 = sbr.rel (0) target = $region41
    $region40: #{tpu_custom_call.1} parent=1 // pred_region
      %s187 = ssub.s32 128, 128
      %188 = vsyncadd [#allocation10], %s187
      %s190 = sshll.u32 [#allocation11], 4
      %s191 = int_to_ptr.vmem [resolvable:$true] %s190
      %193 = dma.vmem_to_hbm [thread:$0]  %s191, 128, %s6, [#allocation10]
    $region41: #{tpu_custom_call.1} parent=1 // pred_fallthru
      _
    // Predicated region
    $region42: #{tpu_custom_call.1} parent=1 // pred_check
      _
    $region43: #{tpu_custom_call.1} parent=1 // pred_check_branch
      %195 = sbr.rel (0) target = $region45
    $region44: #{tpu_custom_call.1} parent=1 // pred_region
      %196 = dma.done [#allocation4], 128
    $region45: #{tpu_custom_call.1} parent=1 // pred_fallthru
      _
    // Predicated region
    $region46: #{tpu_custom_call.1} parent=1 // pred_check
      _
    $region47: #{tpu_custom_call.1} parent=1 // pred_check_branch
      %198 = sbr.rel (0) target = $region49
    $region48: #{tpu_custom_call.1} parent=1 // pred_region
      %199 = dma.done [#allocation10], 128
    $region49: #{tpu_custom_call.1} parent=1 // pred_fallthru
      _
    // Predicated region
    $region50: #{tpu_custom_call.1} parent=1 // pred_check
      _
    $region51: #{tpu_custom_call.1} parent=1 // pred_check_branch
      %201 = sbr.rel (0) target = $region53
    $region52: #{tpu_custom_call.1} parent=1 // pred_region
      %202 = dma.done [#allocation10], 128
    $region53: #{tpu_custom_call.1} parent=1 // pred_fallthru
      _
    %203 = vsyncpa [#allocation3], 1
    %204 = vsyncpa [#allocation6], 1
    %205 = vsyncpa [#allocation4], 1
    %206 = vsyncpa [#allocation10], 1

</llo_original>
